<compile_context>
chip_gen: v5e
topology: v5e:2x2
jax: 0.10.0
libtpu: 0.0.40
codegen_flags: <defaults>
</compile_context>

<pallas_src>
import math
import functools

import jax
import jax.numpy as jnp
from jax.experimental import pallas as pl
from jax.experimental.pallas import tpu as pltpu


# ----------------------------- activations ---------------------------------

def _erf_approx(x):
    # Abramowitz & Stegun 7.1.26: |error| <= 1.5e-7 over the real line.
    a1, a2, a3, a4, a5 = (0.254829592, -0.284496736, 1.421413741,
                          -1.453152027, 1.061405429)
    p = 0.3275911
    z = jnp.abs(x)
    t = 1.0 / (1.0 + p * z)
    poly = ((((a5 * t + a4) * t + a3) * t + a2) * t + a1) * t
    y = 1.0 - poly * jnp.exp(-z * z)
    return jnp.where(x < 0.0, -y, y)


def _gelu(x):
    # Exact (erf-based) gelu, matching the PyTorch module's definition.
    return x * 0.5 * (1.0 + _erf_approx(x * (1.0 / math.sqrt(2.0))))


def _swish(x):
    return x * jax.nn.sigmoid(x)


_ACT = {
    "gelu": _gelu,
    "relu": lambda x: jnp.maximum(x, 0.0),
    "swish": _swish,
}


# ------------------------------- helpers ------------------------------------

def _round_up(n, m):
    return ((n + m - 1) // m) * m


def _sublane_multiple(dtype):
    # 32-bit packs 8 rows / sublane group, 16-bit packs 16, 8-bit packs 32.
    return {4: 8, 2: 16, 1: 32}.get(jnp.dtype(dtype).itemsize, 8)


def _resident_spec(shape):
    """BlockSpec for a grid-invariant operand: constant index_map, and (when
    supported) a single pipeline buffer since the block never changes."""
    index_map = lambda i: (0,) * len(shape)
    try:
        return pl.BlockSpec(shape, index_map, pipeline_mode=pl.Buffered(1))
    except TypeError:
        # Older pl.BlockSpec signature without pipeline_mode: default buffering.
        return pl.BlockSpec(shape, index_map)


# -------------------------------- kernel -------------------------------------

def prediction_head_transform_kernel(
    x_ref,        # (TM, H)  row tile of flattened hidden states
    w_ref,        # (H, H)   dense weight, stored (in, out) -> kernel does x @ W
    b_ref,        # (1, H)   dense bias (f32)
    gamma_ref,    # (1, H)   LayerNorm weight (f32)
    beta_ref,     # (1, H)   LayerNorm bias (f32)
    o_ref,        # (TM, H)
    *,
    act: str,
    ln_eps: float,
):
    w = w_ref[...]
    x = x_ref[...]
    if x.dtype != w.dtype:
        # Per-tile cast only (W was pre-cast once in the wrapper).
        x = x.astype(w.dtype)

    # Dense projection on the MXU with f32 accumulation; bias add in f32.
    y = jnp.dot(x, w, preferred_element_type=jnp.float32) + b_ref[...]

    # Activation (f32 VPU/EUP math).
    y = _ACT[act](y)

    # LayerNorm, single-pass statistics: var = E[y^2] - E[y]^2 (biased),
    # clamped to avoid rsqrt(negative) from f32 cancellation.
    mu = jnp.mean(y, axis=-1, keepdims=True)
    mean_sq = jnp.mean(y * y, axis=-1, keepdims=True)
    var = jnp.maximum(mean_sq - mu * mu, 0.0)
    y_norm = (y - mu) * jax.lax.rsqrt(var + ln_eps)
    out = y_norm * gamma_ref[...] + beta_ref[...]

    o_ref[...] = out.astype(o_ref.dtype)


# ------------------------------- wrapper --------------------------------------

def bert_prediction_head_transform(
    hidden_states,                 # (..., H)
    params,                        # dense_w (H,H) as (in,out); dense_b/ln_gamma/ln_beta (1,H)
    *,
    hidden_act: str = "gelu",
    ln_eps: float = 1e-12,
    block_rows: int = 512,         # 256-aligned default; shrinks to N for small inputs
    matmul_dtype=jnp.bfloat16,     # default: bf16 MXU operands, f32 accumulation
):
    orig_shape = hidden_states.shape
    H = orig_shape[-1]
    xf = hidden_states.reshape(-1, H)
    N = xf.shape[0]

    # Pre-cast the weight ONCE outside the kernel (halves W DMA + VMEM and
    # removes the per-grid-step H x H cast on the resident weight).
    w = params["dense_w"]
    if matmul_dtype is not None and w.dtype != jnp.dtype(matmul_dtype):
        w = w.astype(matmul_dtype)

    itemsize = lambda d: jnp.dtype(d).itemsize

    # Row-tile: dtype-correct sublane multiple, full hidden size on lanes.
    sub = _sublane_multiple(xf.dtype)
    tm = min(_round_up(block_rows, sub), _round_up(N, sub))
    grid = (pl.cdiv(N, tm),)       # no host-side padding; last block may be partial

    # Explicit VMEM budget: double-buffered x/out tiles + weight (worst case
    # double-buffered if Buffered(1) is unavailable) + small operands + headroom.
    vmem_limit = (
        2 * tm * H * itemsize(xf.dtype)
        + 2 * tm * H * itemsize(hidden_states.dtype)
        + 2 * H * H * itemsize(w.dtype)
        + 2 * 3 * H * 4
        + (4 << 20)
    )
    vmem_limit = int(max(16 << 20, min(vmem_limit, 64 << 20)))

    cost = pl.CostEstimate(
        flops=2 * N * H * H,
        transcendentals=2 * N * H,           # exp (gelu) + rsqrt (LayerNorm)
        bytes_accessed=int(
            N * H * itemsize(xf.dtype)
            + H * H * itemsize(w.dtype)
            + 3 * H * 4
            + N * H * itemsize(hidden_states.dtype)
        ),
    )

    kernel = functools.partial(
        prediction_head_transform_kernel, act=hidden_act, ln_eps=ln_eps)

    out = pl.pallas_call(
        kernel,
        out_shape=jax.ShapeDtypeStruct((N, H), hidden_states.dtype),
        grid_spec=pltpu.PrefetchScalarGridSpec(
            num_scalar_prefetch=0,
            grid=grid,
            in_specs=[
                pl.BlockSpec((tm, H), lambda i: (i, 0)),   # x row tile
                _resident_spec((H, H)),                    # W (resident, 1-buffered)
                _resident_spec((1, H)),                    # b
                _resident_spec((1, H)),                    # gamma
                _resident_spec((1, H)),                    # beta
            ],
            out_specs=pl.BlockSpec((tm, H), lambda i: (i, 0)),
        ),
        compiler_params=pltpu.CompilerParams(
            dimension_semantics=("parallel",),             # row axis shards across TCs
            vmem_limit_bytes=vmem_limit,
        ),
        cost_estimate=cost,
    )(xf, w, params["dense_b"], params["ln_gamma"], params["ln_beta"])

    return out.reshape(orig_shape)


# ------------------------------- reference ------------------------------------

def reference_prediction_head_transform(hidden_states, params, *, ln_eps=1e-12,
                                        matmul_dtype=None):
    """Pure-JAX reference mirroring the PyTorch module (erf gelu, LayerNorm).
    Optionally mirrors the kernel's bf16-matmul numeric path."""
    w = params["dense_w"]
    x = hidden_states
    if matmul_dtype is not None:
        w = w.astype(matmul_dtype)
        x = x.astype(matmul_dtype)
    y = jnp.einsum("...h,hk->...k", x, w,
                   preferred_element_type=jnp.float32) + params["dense_b"][0]
    y = y * 0.5 * (1.0 + jax.scipy.special.erf(y / math.sqrt(2.0)))
    mu = jnp.mean(y, axis=-1, keepdims=True)
    var = jnp.mean((y - mu) ** 2, axis=-1, keepdims=True)
    y_norm = (y - mu) / jnp.sqrt(var + ln_eps)
    return y_norm * params["ln_gamma"][0] + params["ln_beta"][0]


if __name__ == "__main__":
    # Small BERT-ish config: batch=2, seq=8, hidden=128 (lane-dense last dim).
    B, S, H = 2, 8, 128

    key = jax.random.PRNGKey(0)
    k_w, k_b, k_g, k_beta, k_x = jax.random.split(key, 5)

    params = {
        # stored as (in, out) == torch weight.T, so kernel/reference do x @ W
        "dense_w": jax.random.normal(k_w, (H, H), jnp.float32) * 0.02,
        "dense_b": jax.random.normal(k_b, (1, H), jnp.float32) * 0.02,
        "ln_gamma": 1.0 + 0.1 * jax.random.normal(k_g, (1, H), jnp.float32),
        "ln_beta": 0.1 * jax.random.normal(k_beta, (1, H), jnp.float32),
    }

    x = jax.random.normal(k_x, (B, S, H), jnp.float32)

    # Default fast path: bf16 MXU operands, f32 accumulation.
    out_bf16 = bert_prediction_head_transform(x, params, hidden_act="gelu")
    out_bf16 = jax.block_until_ready(out_bf16)
    ref_bf16 = reference_prediction_head_transform(
        x, params, matmul_dtype=jnp.bfloat16)
    assert out_bf16.shape == (B, S, H)
    assert jnp.allclose(out_bf16, ref_bf16, atol=2e-3, rtol=2e-3), \
        "bf16 path mismatch vs matched-precision reference"

    # Exact f32 path matches the PyTorch/f32 reference tightly.
    out_f32 = bert_prediction_head_transform(
        x, params, hidden_act="gelu", matmul_dtype=None)
    out_f32 = jax.block_until_ready(out_f32)
    ref_f32 = reference_prediction_head_transform(x, params)
    assert jnp.allclose(out_f32, ref_f32, atol=1e-4, rtol=1e-4), \
        "f32 path mismatch vs reference"

    print("KERNEL_OK")
</pallas_src>

<mosaic_0001>
module attributes {stable_mosaic.version = 11 : i64} {
  func.func @prediction_head_transform_kernel(%arg0: i32, %arg1: memref<16x128xf32, #tpu.memory_space<vmem>>, %arg2: memref<128x128xbf16, #tpu.memory_space<vmem>>, %arg3: memref<1x128xf32, #tpu.memory_space<vmem>>, %arg4: memref<1x128xf32, #tpu.memory_space<vmem>>, %arg5: memref<1x128xf32, #tpu.memory_space<vmem>>, %arg6: memref<16x128xf32, #tpu.memory_space<vmem>>) attributes {dimension_semantics = [#tpu.dimension_semantics<parallel>], iteration_bounds = array<i64: 1>, scalar_prefetch = 0 : i64, scratch_operands = 0 : i64, tpu.core_type = #tpu.core_type<tc>, window_params = [{transform_indices = @transform_0, window_bounds = array<i64: 16, 128>}, {pipeline_mode = #tpu.pipeline_mode<synchronous>, transform_indices = @transform_1, window_bounds = array<i64: 128, 128>}, {pipeline_mode = #tpu.pipeline_mode<synchronous>, transform_indices = @transform_2, window_bounds = array<i64: 1, 128>}, {pipeline_mode = #tpu.pipeline_mode<synchronous>, transform_indices = @transform_3, window_bounds = array<i64: 1, 128>}, {pipeline_mode = #tpu.pipeline_mode<synchronous>, transform_indices = @transform_4, window_bounds = array<i64: 1, 128>}, {transform_indices = @transform_5, window_bounds = array<i64: 16, 128>}]} {
    %c0 = arith.constant 0 : index
    %c0_0 = arith.constant 0 : index
    %0 = vector.load %arg2[%c0, %c0_0] : memref<128x128xbf16, #tpu.memory_space<vmem>>, vector<128x128xbf16>
    %c0_1 = arith.constant 0 : index
    %c0_2 = arith.constant 0 : index
    %1 = vector.load %arg1[%c0_1, %c0_2] : memref<16x128xf32, #tpu.memory_space<vmem>>, vector<16x128xf32>
    %2 = arith.truncf %1 : vector<16x128xf32> to vector<16x128xbf16>
    %cst = arith.constant dense<0.000000e+00> : vector<16x128xf32>
    %3 = tpu.matmul %2, %0, %cst {dimension_numbers = #tpu.dot_dimension_numbers<[1], [0], [0], [1], [0, 0, 1, 1], [], []>} : vector<16x128xbf16>, vector<128x128xbf16>, vector<16x128xf32> -> vector<16x128xf32>
    %c0_3 = arith.constant 0 : index
    %c0_4 = arith.constant 0 : index
    %4 = vector.load %arg3[%c0_3, %c0_4] : memref<1x128xf32, #tpu.memory_space<vmem>>, vector<1x128xf32>
    %5 = vector.broadcast %4 : vector<1x128xf32> to vector<16x128xf32>
    %6 = arith.addf %3, %5 : vector<16x128xf32>
    %cst_5 = arith.constant 5.000000e-01 : f32
    %7 = vector.broadcast %cst_5 : f32 to vector<16x128xf32>
    %8 = arith.mulf %6, %7 : vector<16x128xf32>
    %cst_6 = arith.constant 0.707106769 : f32
    %9 = vector.broadcast %cst_6 : f32 to vector<16x128xf32>
    %10 = arith.mulf %6, %9 : vector<16x128xf32>
    %11 = math.absf %10 : vector<16x128xf32>
    %cst_7 = arith.constant 0.327591091 : f32
    %12 = vector.broadcast %cst_7 : f32 to vector<16x128xf32>
    %13 = arith.mulf %12, %11 : vector<16x128xf32>
    %cst_8 = arith.constant 1.000000e+00 : f32
    %14 = vector.broadcast %cst_8 : f32 to vector<16x128xf32>
    %15 = arith.addf %14, %13 : vector<16x128xf32>
    %cst_9 = arith.constant 1.000000e+00 : f32
    %16 = vector.broadcast %cst_9 : f32 to vector<16x128xf32>
    %17 = arith.divf %16, %15 : vector<16x128xf32>
    %cst_10 = arith.constant 1.06140542 : f32
    %18 = vector.broadcast %cst_10 : f32 to vector<16x128xf32>
    %19 = arith.mulf %18, %17 : vector<16x128xf32>
    %cst_11 = arith.constant -1.45315206 : f32
    %20 = vector.broadcast %cst_11 : f32 to vector<16x128xf32>
    %21 = arith.addf %19, %20 : vector<16x128xf32>
    %22 = arith.mulf %21, %17 : vector<16x128xf32>
    %cst_12 = arith.constant 1.42141378 : f32
    %23 = vector.broadcast %cst_12 : f32 to vector<16x128xf32>
    %24 = arith.addf %22, %23 : vector<16x128xf32>
    %25 = arith.mulf %24, %17 : vector<16x128xf32>
    %cst_13 = arith.constant -0.284496725 : f32
    %26 = vector.broadcast %cst_13 : f32 to vector<16x128xf32>
    %27 = arith.addf %25, %26 : vector<16x128xf32>
    %28 = arith.mulf %27, %17 : vector<16x128xf32>
    %cst_14 = arith.constant 0.254829586 : f32
    %29 = vector.broadcast %cst_14 : f32 to vector<16x128xf32>
    %30 = arith.addf %28, %29 : vector<16x128xf32>
    %31 = arith.mulf %30, %17 : vector<16x128xf32>
    %cst_15 = arith.constant 0.000000e+00 : f32
    %32 = vector.broadcast %cst_15 : f32 to vector<16x128xf32>
    %33 = arith.subf %32, %11 : vector<16x128xf32>
    %34 = arith.mulf %33, %11 : vector<16x128xf32>
    %35 = math.exp %34 : vector<16x128xf32>
    %36 = arith.mulf %31, %35 : vector<16x128xf32>
    %cst_16 = arith.constant 1.000000e+00 : f32
    %37 = vector.broadcast %cst_16 : f32 to vector<16x128xf32>
    %38 = arith.subf %37, %36 : vector<16x128xf32>
    %cst_17 = arith.constant 0.000000e+00 : f32
    %39 = vector.broadcast %cst_17 : f32 to vector<16x128xf32>
    %40 = arith.cmpf olt, %10, %39 : vector<16x128xf32>
    %cst_18 = arith.constant 0.000000e+00 : f32
    %41 = vector.broadcast %cst_18 : f32 to vector<16x128xf32>
    %42 = arith.subf %41, %38 : vector<16x128xf32>
    %43 = arith.select %40, %42, %38 : vector<16x128xi1>, vector<16x128xf32>
    %cst_19 = arith.constant 1.000000e+00 : f32
    %44 = vector.broadcast %cst_19 : f32 to vector<16x128xf32>
    %45 = arith.addf %44, %43 : vector<16x128xf32>
    %46 = arith.mulf %8, %45 : vector<16x128xf32>
    %cst_20 = arith.constant dense<0.000000e+00> : vector<16xf32>
    %47 = vector.multi_reduction <add>, %46, %cst_20 [1] : vector<16x128xf32> to vector<16xf32>
    %48 = vector.shape_cast %47 : vector<16xf32> to vector<16x1xf32>
    %cst_21 = arith.constant 1.280000e+02 : f32
    %49 = vector.broadcast %cst_21 : f32 to vector<16x1xf32>
    %50 = arith.divf %48, %49 : vector<16x1xf32>
    %51 = arith.mulf %46, %46 : vector<16x128xf32>
    %cst_22 = arith.constant dense<0.000000e+00> : vector<16xf32>
    %52 = vector.multi_reduction <add>, %51, %cst_22 [1] : vector<16x128xf32> to vector<16xf32>
    %53 = vector.shape_cast %52 : vector<16xf32> to vector<16x1xf32>
    %cst_23 = arith.constant 1.280000e+02 : f32
    %54 = vector.broadcast %cst_23 : f32 to vector<16x1xf32>
    %55 = arith.divf %53, %54 : vector<16x1xf32>
    %56 = arith.mulf %50, %50 : vector<16x1xf32>
    %57 = arith.subf %55, %56 : vector<16x1xf32>
    %cst_24 = arith.constant 0.000000e+00 : f32
    %58 = vector.broadcast %cst_24 : f32 to vector<16x1xf32>
    %59 = arith.maximumf %57, %58 : vector<16x1xf32>
    %60 = vector.broadcast %50 : vector<16x1xf32> to vector<16x128xf32>
    %61 = arith.subf %46, %60 : vector<16x128xf32>
    %cst_25 = arith.constant 9.99999996E-13 : f32
    %62 = vector.broadcast %cst_25 : f32 to vector<16x1xf32>
    %63 = arith.addf %59, %62 : vector<16x1xf32>
    %64 = math.rsqrt %63 : vector<16x1xf32>
    %65 = vector.broadcast %64 : vector<16x1xf32> to vector<16x128xf32>
    %66 = arith.mulf %61, %65 : vector<16x128xf32>
    %c0_26 = arith.constant 0 : index
    %c0_27 = arith.constant 0 : index
    %67 = vector.load %arg4[%c0_26, %c0_27] : memref<1x128xf32, #tpu.memory_space<vmem>>, vector<1x128xf32>
    %68 = vector.broadcast %67 : vector<1x128xf32> to vector<16x128xf32>
    %69 = arith.mulf %66, %68 : vector<16x128xf32>
    %c0_28 = arith.constant 0 : index
    %c0_29 = arith.constant 0 : index
    %70 = vector.load %arg5[%c0_28, %c0_29] : memref<1x128xf32, #tpu.memory_space<vmem>>, vector<1x128xf32>
    %71 = vector.broadcast %70 : vector<1x128xf32> to vector<16x128xf32>
    %72 = arith.addf %69, %71 : vector<16x128xf32>
    %c0_30 = arith.constant 0 : index
    %c0_31 = arith.constant 0 : index
    %73 = vector.load %arg6[%c0_30, %c0_31] : memref<16x128xf32, #tpu.memory_space<vmem>>, vector<16x128xf32>
    tpu.vector_store %arg6[%c0_30, %c0_31], %72 {strides = array<i32>} : memref<16x128xf32, #tpu.memory_space<vmem>>, vector<16x128xf32>,
    return
  }
  func.func @transform_0(%arg0: i32) -> (i32, i32) {
    %c0_i32 = arith.constant 0 : i32
    %c0_i32_0 = arith.constant 0 : i32
    return %arg0, %c0_i32 : i32, i32
  }
  func.func @transform_1(%arg0: i32) -> (i32, i32) {
    %c0_i32 = arith.constant 0 : i32
    %c0_i32_0 = arith.constant 0 : i32
    %c0_i32_1 = arith.constant 0 : i32
    return %c0_i32, %c0_i32_0 : i32, i32
  }
  func.func @transform_2(%arg0: i32) -> (i32, i32) {
    %c0_i32 = arith.constant 0 : i32
    %c0_i32_0 = arith.constant 0 : i32
    %c0_i32_1 = arith.constant 0 : i32
    return %c0_i32, %c0_i32_0 : i32, i32
  }
  func.func @transform_3(%arg0: i32) -> (i32, i32) {
    %c0_i32 = arith.constant 0 : i32
    %c0_i32_0 = arith.constant 0 : i32
    %c0_i32_1 = arith.constant 0 : i32
    return %c0_i32, %c0_i32_0 : i32, i32
  }
  func.func @transform_4(%arg0: i32) -> (i32, i32) {
    %c0_i32 = arith.constant 0 : i32
    %c0_i32_0 = arith.constant 0 : i32
    %c0_i32_1 = arith.constant 0 : i32
    return %c0_i32, %c0_i32_0 : i32, i32
  }
  func.func @transform_5(%arg0: i32) -> (i32, i32) {
    %c0_i32 = arith.constant 0 : i32
    %c0_i32_0 = arith.constant 0 : i32
    return %arg0, %c0_i32 : i32, i32
  }
}

</mosaic_0001>

<llo_original>
// kernel: tpu_custom_call.1
$region0: #{tpu_custom_call.1}
  #allocation0 [shape = 'u32[]', space=smem, size = 0x4, offset = 0x4, fixed_abs, tag = 'smem constant byte address 0x4 - core index']
  #allocation1 [shape = 'u32[72,128]{1,0:T(1,128)}', space=vmem, size = 0x9000, scoped, tag = 'internal scratch']
  %s0 = inlined_call_operand.hbm [shape: f32[16,128], index: 0, kind: input, shape index: {}]
  %s1 = inlined_call_operand.hbm [shape: bf16[128,128], index: 1, kind: input, shape index: {}]
  %s2 = inlined_call_operand.vmem [shape: f32[1,128], index: 2, kind: input, shape index: {}]
  %s3 = inlined_call_operand.vmem [shape: f32[1,128], index: 3, kind: input, shape index: {}]
  %s4 = inlined_call_operand.vmem [shape: f32[1,128], index: 4, kind: input, shape index: {}]
  %s5 = inlined_call_operand.hbm [shape: f32[16,128], index: 5, kind: output, shape index: {}]
  %s6 = sld [smem:[#allocation0]]
  $region38: #{tpu_custom_call.1} parent=0
    _
  %s8 = ssub.s32 1, %s6
  %s9 = scalar_select 0, %s8, %s6
  $region1: #{tpu_custom_call.1} parent=0
    #allocation2 [shape = 'u8[8192]{0}', space=vmem, size = 0x2000, scoped, tag = 'input window, operand 0, single buffered']
    #allocation3 [shape = 's32[1]{0}', space=sflag, size = 0x4, scoped, tag = 'scoped memory for tpu_custom_call.1']
    #allocation4 [shape = 's32[1]{0}', space=sflag, size = 0x4, scoped, tag = 'scoped memory for tpu_custom_call.1']
    #allocation5 [shape = 'u8[32768]{0}', space=vmem, size = 0x8000, scoped, tag = 'input window, operand 1, single buffered']
    #allocation6 [shape = 's32[1]{0}', space=sflag, size = 0x4, scoped, tag = 'scoped memory for tpu_custom_call.1']
    #allocation7 [shape = 'u8[8192]{0}', space=vmem, size = 0x2000, scoped, tag = 'output window, operand 0, single buffered']
    %10 = vsyncpa [#allocation3], 0
    %11 = vsyncpa [#allocation6], 0
    %12 = vsyncpa [#allocation4], 0
    // Predicated region
    $region2: #{tpu_custom_call.1} parent=1 // pred_check
      _
    $region3: #{tpu_custom_call.1} parent=1 // pred_check_branch
      %14 = sbr.rel (0) target = $region5
    $region4: #{tpu_custom_call.1} parent=1 // pred_region
      %16 = vsyncadd [#allocation3], 0
      %s17 = sshll.u32 %s0, 4
      %s18 = int_to_ptr.hbm [resolvable:$true] %s17
      %s19 = sshll.u32 [#allocation2], 4
      %s20 = int_to_ptr.vmem [resolvable:$true] %s19
      %25 = dma.hbm_to_vmem [thread:$0]  %s18, 256, %s20, [#allocation3], 128, 128, 8
    $region5: #{tpu_custom_call.1} parent=1 // pred_fallthru
      _
    // Predicated region
    $region6: #{tpu_custom_call.1} parent=1 // pred_check
      _
    $region7: #{tpu_custom_call.1} parent=1 // pred_check_branch
      %27 = sbr.rel (0) target = $region9
    $region8: #{tpu_custom_call.1} parent=1 // pred_region
      %29 = vsyncadd [#allocation6], 0
      %s30 = sshll.u32 %s1, 4
      %s31 = int_to_ptr.hbm [resolvable:$true] %s30
      %s32 = sshll.u32 [#allocation5], 4
      %s33 = int_to_ptr.vmem [resolvable:$true] %s32
      %38 = dma.hbm_to_vmem [thread:$0]  %s31, 1024, %s33, [#allocation6], 64, 64, 4
    $region9: #{tpu_custom_call.1} parent=1 // pred_fallthru
      _
    // Predicated region
    $region10: #{tpu_custom_call.1} parent=1 // pred_check
      _
    $region11: #{tpu_custom_call.1} parent=1 // pred_check_branch
      %40 = sbr.rel (0) target = $region13
    $region12: #{tpu_custom_call.1} parent=1 // pred_region
      _
    $region13: #{tpu_custom_call.1} parent=1 // pred_fallthru
      _
    // Predicated region
    $region14: #{tpu_custom_call.1} parent=1 // pred_check
      _
    $region15: #{tpu_custom_call.1} parent=1 // pred_check_branch
      %42 = sbr.rel (0) target = $region17
    $region16: #{tpu_custom_call.1} parent=1 // pred_region
      _
    $region17: #{tpu_custom_call.1} parent=1 // pred_fallthru
      _
    // Predicated region
    $region18: #{tpu_custom_call.1} parent=1 // pred_check
      _
    $region19: #{tpu_custom_call.1} parent=1 // pred_check_branch
      %44 = sbr.rel (0) target = $region21
    $region20: #{tpu_custom_call.1} parent=1 // pred_region
      _
    $region21: #{tpu_custom_call.1} parent=1 // pred_fallthru
      _
    // Predicated region
    $region22: #{tpu_custom_call.1} parent=1 // pred_check
      _
    $region23: #{tpu_custom_call.1} parent=1 // pred_check_branch
      %46 = sbr.rel (0) target = $region25
    $region24: #{tpu_custom_call.1} parent=1 // pred_region
      %48 = dma.done [#allocation3], 256
    $region25: #{tpu_custom_call.1} parent=1 // pred_fallthru
      _
    // Predicated region
    $region26: #{tpu_custom_call.1} parent=1 // pred_check
      _
    $region27: #{tpu_custom_call.1} parent=1 // pred_check_branch
      %50 = sbr.rel (0) target = $region29
    $region28: #{tpu_custom_call.1} parent=1 // pred_region
      %52 = dma.done [#allocation6], 1024
    $region29: #{tpu_custom_call.1} parent=1 // pred_fallthru
      _
    %v53 = vld [vmem:[#allocation5] sm:$0xf]
    %v54 = vld [vmem:[#allocation5 + $0x4] sm:$0xf]
    %v55 = vld [vmem:[#allocation5 + $0x8] sm:$0xf]
    %v56 = vld [vmem:[#allocation5 + $0xc] sm:$0xf]
    %v57 = vld [vmem:[#allocation5 + $0x10] sm:$0xf]
    %v58 = vld [vmem:[#allocation5 + $0x14] sm:$0xf]
    %v59 = vld [vmem:[#allocation5 + $0x18] sm:$0xf]
    %v60 = vld [vmem:[#allocation5 + $0x1c] sm:$0xf]
    %v61 = vld [vmem:[#allocation5 + $0x20] sm:$0xf]
    %v62 = vld [vmem:[#allocation5 + $0x24] sm:$0xf]
    %v63 = vld [vmem:[#allocation5 + $0x28] sm:$0xf]
    %v64 = vld [vmem:[#allocation5 + $0x2c] sm:$0xf]
    %v65 = vld [vmem:[#allocation5 + $0x30] sm:$0xf]
    %v66 = vld [vmem:[#allocation5 + $0x34] sm:$0xf]
    %v67 = vld [vmem:[#allocation5 + $0x38] sm:$0xf]
    %v68 = vld [vmem:[#allocation5 + $0x3c] sm:$0xf]
    %v69 = vld [vmem:[#allocation2] sm:$0xff]
    %v70 = vld [vmem:[#allocation2 + $0x8] sm:$0xff]
    %v71 = vpack.c.bf16 %v70, %v69
    %v72 = vld [vmem:[%s2] sm:$0x1]
    %v74 = vperm.slane %v72, 0
    %v92 = vunpack.c.l.b16 %v53
    %v93 = vunpack.c.l.b16 %v54
    %v94 = vunpack.c.l.b16 %v55
    %v95 = vunpack.c.l.b16 %v56
    %v96 = vunpack.c.l.b16 %v57
    %v97 = vunpack.c.l.b16 %v58
    %v98 = vunpack.c.l.b16 %v59
    %v99 = vunpack.c.l.b16 %v60
    %v100 = vunpack.c.l.b16 %v61
    %v101 = vunpack.c.l.b16 %v62
    %v102 = vunpack.c.l.b16 %v63
    %v103 = vunpack.c.l.b16 %v64
    %v104 = vunpack.c.l.b16 %v65
    %v105 = vunpack.c.l.b16 %v66
    %v106 = vunpack.c.l.b16 %v67
    %v107 = vunpack.c.l.b16 %v68
    %v108 = vpack.c.b16 %v93, %v92
    %v109 = vpack.c.b16 %v95, %v94
    %v110 = vpack.c.b16 %v97, %v96
    %v111 = vpack.c.b16 %v99, %v98
    %v112 = vpack.c.b16 %v101, %v100
    %v113 = vpack.c.b16 %v103, %v102
    %v114 = vpack.c.b16 %v105, %v104
    %v115 = vpack.c.b16 %v107, %v106
    %124 = vmatpush.bf16.msra.mxu0 %v115
    %125 = vmatpush.bf16.msra.mxu0 %v114
    %126 = vmatpush.bf16.msra.mxu0 %v113
    %127 = vmatpush.bf16.msra.mxu0 %v112
    %128 = vmatpush.bf16.msra.mxu0 %v111
    %129 = vmatpush.bf16.msra.mxu0 %v110
    %130 = vmatpush.bf16.msra.mxu0 %v109
    %131 = vmatpush.bf16.msra.mxu0 %v108
    %132 = vmatmul.bf16.gmra.mxu0 %v71
    %v133 = vpop.f32.mrf.mxu0
    %v134 = vadd.f32 %v74, %v133
    %v135 = vpop.f32.mrf.mxu0
    %v136 = vadd.f32 %v74, %v135
    %137 = vdwg.mxu0
    %v138 = vmul.f32 %v134, 0.5
    %v139 = vmul.f32 %v136, 0.5
    %v140 = vmul.f32 %v134, 0.70710677
    %v141 = vmul.f32 %v136, 0.70710677
    %v142 = vand.u32 2147483647, %v140
    %v143 = vand.u32 2147483647, %v141
    %v144 = vmul.f32 %v142, 0.3275911
    %v145 = vmul.f32 %v143, 0.3275911
    %v146 = vadd.f32 %v144, 1.0
    %v147 = vadd.f32 %v145, 1.0
    %v148 = vrcp.pop %v146
    %v149 = vmul.f32 %v146, %v148
    %v150 = vsub.f32 1.0, %v149
    %v151 = vmul.f32 %v148, %v150
    %v152 = vadd.f32 %v148, %v151
    %vm153 = vweird.f32 %v146
    %vm154 = vweird.f32 %v148
    %vm155 = vmor %vm153, %vm154
    %v156 = vsel %vm155, %v148, %v152
    %v157 = vand.u32 2147483647, %v146
    %vm158 = vcmp.eq.f32.partialorder %v157, 8.507059e+37
    %v159 = vand.u32 %v146, 2147483648
    %v160 = vor.u32 1.1754944e-38, %v159
    %v161 = vsel %vm158, %v160, %v156
    %v162 = vmul.f32 1.0, %v161
    %v163 = vrcp.pop %v147
    %v164 = vmul.f32 %v147, %v163
    %v165 = vsub.f32 1.0, %v164
    %v166 = vmul.f32 %v163, %v165
    %v167 = vadd.f32 %v163, %v166
    %vm168 = vweird.f32 %v147
    %vm169 = vweird.f32 %v163
    %vm170 = vmor %vm168, %vm169
    %v171 = vsel %vm170, %v163, %v167
    %v172 = vand.u32 2147483647, %v147
    %vm173 = vcmp.eq.f32.partialorder %v172, 8.507059e+37
    %v174 = vand.u32 %v147, 2147483648
    %v175 = vor.u32 1.1754944e-38, %v174
    %v176 = vsel %vm173, %v175, %v171
    %v177 = vmul.f32 1.0, %v176
    %v178 = vmul.f32 %v162, 1.0614054
    %v179 = vmul.f32 %v177, 1.0614054
    %v180 = vadd.f32 %v178, -1.4531521
    %v181 = vadd.f32 %v179, -1.4531521
    %v182 = vmul.f32 %v180, %v162
    %v183 = vmul.f32 %v181, %v177
    %v184 = vadd.f32 %v182, 1.4214138
    %v185 = vadd.f32 %v183, 1.4214138
    %v186 = vmul.f32 %v184, %v162
    %v187 = vmul.f32 %v185, %v177
    %v188 = vadd.f32 %v186, -0.28449672
    %v189 = vadd.f32 %v187, -0.28449672
    %v190 = vmul.f32 %v188, %v162
    %v191 = vmul.f32 %v189, %v177
    %v192 = vadd.f32 %v190, 0.2548296
    %v193 = vadd.f32 %v191, 0.2548296
    %v194 = vmul.f32 %v192, %v162
    %v195 = vmul.f32 %v193, %v177
    %v196 = vsub.f32 0.0, %v142
    %v197 = vsub.f32 0.0, %v143
    %v198 = vmul.f32 %v196, %v142
    %v199 = vmul.f32 %v197, %v143
    %v200 = vmul.f32 %v198, 1.442695
    %v201 = vpow.pop %v200
    %v202 = vmul.f32 %v199, 1.442695
    %v203 = vpow.pop %v202
    %v204 = vmul.f32 %v194, %v201
    %v205 = vmul.f32 %v195, %v203
    %v206 = vsub.f32 1.0, %v204
    %v207 = vsub.f32 1.0, %v205
    %vm208 = vcmp.lt.f32.partialorder %v140, 0.0
    %vm209 = vcmp.lt.f32.partialorder %v141, 0.0
    %v210 = vsub.f32 0.0, %v206
    %v211 = vsub.f32 0.0, %v207
    %v212 = vsel %vm208, %v210, %v206
    %v213 = vsel %vm209, %v211, %v207
    %v214 = vadd.f32 %v212, 1.0
    %v215 = vadd.f32 %v213, 1.0
    %v216 = vmul.f32 %v138, %v214
    %v217 = vmul.f32 %v139, %v215
    %218 = vadd.xlane.f32.xlu0 %v216
    %v219 = vpop.xlane.xlu0 %218
    %220 = vadd.xlane.f32.xlu0 %v217
    %v221 = vpop.xlane.xlu0 %220
    %v222 = vrcp.pop 128.0
    %v223 = vmul.f32 128.0, %v222
    %v224 = vsub.f32 1.0, %v223
    %v225 = vmul.f32 %v222, %v224
    %v226 = vadd.f32 %v222, %v225
    %vm227 = vweird.f32 %v222
    %v228 = vsel %vm227, %v222, %v226
    %v229 = vmul.f32 %v219, %v228
    %v230 = vmul.f32 %v221, %v228
    %v231 = vmul.f32 %v216, %v216
    %v232 = vmul.f32 %v217, %v217
    %233 = vadd.xlane.f32.xlu0 %v231
    %v234 = vpop.xlane.xlu0 %233
    %235 = vadd.xlane.f32.xlu0 %v232
    %v236 = vpop.xlane.xlu0 %235
    %v237 = vmul.f32 %v234, %v228
    %v238 = vmul.f32 %v236, %v228
    %v239 = vmul.f32 %v229, %v229
    %v240 = vmul.f32 %v230, %v230
    %v241 = vsub.f32 %v237, %v239
    %v242 = vsub.f32 %v238, %v240
    %v243 = vmax.f32 %v241, 0.0
    %v244 = vmax.f32 %v242, 0.0
    %v245 = vsub.f32 %v216, %v229
    %v246 = vsub.f32 %v217, %v230
    %v247 = vadd.f32 %v243, 1e-12
    %v248 = vadd.f32 %v244, 1e-12
    %v249 = vrsqrt.pop %v247
    %v250 = vmul.f32 %v249, %v247
    %v251 = vmul.f32 %v250, %v249
    %v252 = vmul.f32 0.5, %v251
    %v253 = vsub.f32 1.5, %v252
    %v254 = vmul.f32 %v249, %v253
    %vm255 = vweird.f32 %v247
    %vm256 = vweird.f32 %v249
    %vm257 = vmor %vm255, %vm256
    %v258 = vsel %vm257, %v249, %v254
    %v259 = vrsqrt.pop %v248
    %v260 = vmul.f32 %v259, %v248
    %v261 = vmul.f32 %v260, %v259
    %v262 = vmul.f32 0.5, %v261
    %v263 = vsub.f32 1.5, %v262
    %v264 = vmul.f32 %v259, %v263
    %vm265 = vweird.f32 %v248
    %vm266 = vweird.f32 %v259
    %vm267 = vmor %vm265, %vm266
    %v268 = vsel %vm267, %v259, %v264
    %v269 = vmul.f32 %v245, %v258
    %v270 = vmul.f32 %v246, %v268
    %v271 = vld [vmem:[%s3] sm:$0x1]
    %v273 = vperm.slane %v271, 0
    %v275 = vmul.f32 %v269, %v273
    %v276 = vmul.f32 %v270, %v273
    %v277 = vld [vmem:[%s4] sm:$0x1]
    %v279 = vperm.slane %v277, 0
    %v281 = vadd.f32 %v275, %v279
    %v282 = vadd.f32 %v276, %v279
    %283 = vst [vmem:[#allocation7] sm:$0xff] %v281
    %284 = vst [vmem:[#allocation7 + $0x8] sm:$0xff] %v282
    // Predicated region
    $region30: #{tpu_custom_call.1} parent=1 // pred_check
      _
    $region31: #{tpu_custom_call.1} parent=1 // pred_check_branch
      %286 = sbr.rel (0) target = $region33
    $region32: #{tpu_custom_call.1} parent=1 // pred_region
      %288 = vsyncadd [#allocation4], 0
      %s289 = sshll.u32 [#allocation7], 4
      %s290 = int_to_ptr.vmem [resolvable:$true] %s289
      %s291 = sshll.u32 %s5, 4
      %s292 = int_to_ptr.hbm [resolvable:$true] %s291
      %297 = dma.vmem_to_hbm [thread:$0]  %s290, 256, %s292, [#allocation4], 128, 128, 8
    $region33: #{tpu_custom_call.1} parent=1 // pred_fallthru
      _
    // Predicated region
    $region34: #{tpu_custom_call.1} parent=1 // pred_check
      _
    $region35: #{tpu_custom_call.1} parent=1 // pred_check_branch
      %299 = sbr.rel (0) target = $region37
    $region36: #{tpu_custom_call.1} parent=1 // pred_region
      %301 = dma.done [#allocation4], 256
    $region37: #{tpu_custom_call.1} parent=1 // pred_fallthru
      _
    %302 = vsyncpa [#allocation3], 1
    %303 = vsyncpa [#allocation6], 1
    %304 = vsyncpa [#allocation4], 1

</llo_original>
